<compile_context>
chip_gen: v6e
topology: v6e:2x2x1
jax: 0.10.0
libtpu: 0.0.40
codegen_flags: <defaults>
</compile_context>

<pallas_src>
import functools

import jax
import jax.numpy as jnp
from jax.experimental import pallas as pl
from jax.experimental.pallas import tpu as pltpu


def _preemphasis_kernel(x_ref, o_ref, *, coef: float):
    x = x_ref[...]                                       # (tb, T)
    # prev[t] = x[t-1] for t >= 1 ; prev[0] = x[1]  (reflect pad of 1)
    prev = jnp.concatenate([x[:, 1:2], x[:, :-1]], axis=1)
    o_ref[...] = x - jnp.asarray(coef, x.dtype) * prev


def _choose_block_rows(B: int, T: int, itemsize: int) -> int:
    """Largest row tile (multiple of 8, or full B) with block bytes <= ~4 MiB."""
    target_bytes = 4 * 1024 * 1024
    rows = target_bytes // max(1, T * itemsize)
    rows = (rows // 8) * 8
    if rows < 8:
        # TODO(synk): extremely long T (> ~1M samples f32) would want a
        # T-tiled variant with an explicit 1-sample halo between T-blocks.
        rows = 8
    return B if rows >= B else int(rows)


def pre_emphasis(x: jax.Array, coef: float = 0.97) -> jax.Array:
    """Pallas implementation of PreEmphasis.forward.

    Accepts (B, T) or (B, 1, T); returns (B, T).
    """
    if x.ndim == 3:
        assert x.shape[1] == 1, "expected a single channel"
        x = x[:, 0, :]
    assert x.ndim == 2
    B, T = x.shape
    assert T >= 2, "reflect pad needs at least two samples"

    itemsize = jnp.dtype(x.dtype).itemsize
    tb = _choose_block_rows(B, T, itemsize)
    grid = (pl.cdiv(B, tb),)

    kernel = functools.partial(_preemphasis_kernel, coef=coef)
    return pl.pallas_call(
        kernel,
        out_shape=jax.ShapeDtypeStruct((B, T), x.dtype),
        grid=grid,
        in_specs=[pl.BlockSpec((tb, T), lambda i: (i, 0))],
        out_specs=pl.BlockSpec((tb, T), lambda i: (i, 0)),
        compiler_params=pltpu.CompilerParams(
            dimension_semantics=("parallel",)),
        cost_estimate=pl.CostEstimate(
            flops=2 * B * T,
            transcendentals=0,
            bytes_accessed=2 * B * T * itemsize),
    )(x)


def _reference(x: jax.Array, coef: float = 0.97) -> jax.Array:
    # Pure-JAX reference mirroring F.pad(..., 'reflect') + conv1d([-coef, 1.0]).
    if x.ndim == 3:
        x = x[:, 0, :]
    padded = jnp.concatenate([x[:, 1:2], x], axis=1)   # reflect-pad 1 on the left
    return padded[:, 1:] - coef * padded[:, :-1]


if __name__ == "__main__":
    key = jax.random.PRNGKey(0)
    coef = 0.97  # module default; flipped_filter buffer is just [-coef, 1.0]

    # Small, deterministic example inputs.
    B, T = 4, 128
    x2d = jax.random.normal(key, (B, T), dtype=jnp.float32)
    x3d = x2d[:, None, :]                               # (B, 1, T) path

    y2d = jax.block_until_ready(pre_emphasis(x2d, coef=coef))
    y3d = jax.block_until_ready(pre_emphasis(x3d, coef=coef))

    y_ref = _reference(x2d, coef=coef)
    assert y2d.shape == (B, T)
    assert y3d.shape == (B, T)
    assert jnp.allclose(y2d, y_ref, atol=1e-6), "mismatch vs reference (2-D input)"
    assert jnp.allclose(y3d, y_ref, atol=1e-6), "mismatch vs reference (3-D input)"

    print("KERNEL_OK")
</pallas_src>

<mosaic_0001>
module attributes {stable_mosaic.version = 11 : i64} {
  func.func @_preemphasis_kernel(%arg0: i32, %arg1: memref<4x128xf32, #tpu.memory_space<vmem>>, %arg2: memref<4x128xf32, #tpu.memory_space<vmem>>) attributes {dimension_semantics = [#tpu.dimension_semantics<parallel>], iteration_bounds = array<i64: 1>, scalar_prefetch = 0 : i64, scratch_operands = 0 : i64, tpu.core_type = #tpu.core_type<tc>, window_params = [{transform_indices = @transform_0, window_bounds = array<i64: 4, 128>}, {transform_indices = @transform_1, window_bounds = array<i64: 4, 128>}]} {
    %c0 = arith.constant 0 : index
    %c0_0 = arith.constant 0 : index
    %0 = vector.load %arg1[%c0, %c0_0] : memref<4x128xf32, #tpu.memory_space<vmem>>, vector<4x128xf32>
    %1 = vector.extract_strided_slice %0 {offsets = [0, 1], sizes = [4, 1], strides = [1, 1]} : vector<4x128xf32> to vector<4x1xf32>
    %2 = vector.extract_strided_slice %0 {offsets = [0, 0], sizes = [4, 127], strides = [1, 1]} : vector<4x128xf32> to vector<4x127xf32>
    %3 = tpu.concatenate %1, %2 in 1 : vector<4x1xf32>, vector<4x127xf32> -> vector<4x128xf32>
    %cst = arith.constant 9.700000e-01 : f32
    %4 = vector.broadcast %cst : f32 to vector<4x128xf32>
    %5 = arith.mulf %4, %3 : vector<4x128xf32>
    %6 = arith.subf %0, %5 : vector<4x128xf32>
    %c0_1 = arith.constant 0 : index
    %c0_2 = arith.constant 0 : index
    %7 = vector.load %arg2[%c0_1, %c0_2] : memref<4x128xf32, #tpu.memory_space<vmem>>, vector<4x128xf32>
    tpu.vector_store %arg2[%c0_1, %c0_2], %6 {strides = array<i32>} : memref<4x128xf32, #tpu.memory_space<vmem>>, vector<4x128xf32>,
    return
  }
  func.func @transform_0(%arg0: i32) -> (i32, i32) {
    %c0_i32 = arith.constant 0 : i32
    %c0_i32_0 = arith.constant 0 : i32
    return %arg0, %c0_i32 : i32, i32
  }
  func.func @transform_1(%arg0: i32) -> (i32, i32) {
    %c0_i32 = arith.constant 0 : i32
    %c0_i32_0 = arith.constant 0 : i32
    return %arg0, %c0_i32 : i32, i32
  }
}

</mosaic_0001>

<llo_original>
// kernel: tpu_custom_call.1
$region0: #{tpu_custom_call.1}
  #allocation0 [shape = 'u32[]', space=smem, size = 0x4, offset = 0x4, fixed_abs, tag = 'smem constant byte address 0x4 - core index']
  #allocation1 [shape = 'u32[144,128]{1,0:T(1,128)}', space=vmem, size = 0x12000, scoped, tag = 'internal scratch']
  %s0 = inlined_call_operand.hbm [shape: f32[4,128], index: 0, kind: input, shape index: {}]
  %s1 = inlined_call_operand.hbm [shape: f32[4,128], index: 1, kind: output, shape index: {}]
  %s2 = sld [smem:[#allocation0]]
  $region18: #{tpu_custom_call.1} parent=0
    _
  %s4 = ssub.s32 1, %s2
  %s5 = scalar_select 0, %s4, %s2
  $region1: #{tpu_custom_call.1} parent=0
    #allocation2 [shape = 'u8[2048]{0}', space=vmem, size = 0x800, scoped, tag = 'input window, operand 0, single buffered']
    #allocation3 [shape = 's32[1]{0}', space=sflag, size = 0x4, scoped, tag = 'scoped memory for tpu_custom_call.1']
    #allocation4 [shape = 's32[1]{0}', space=sflag, size = 0x4, scoped, tag = 'scoped memory for tpu_custom_call.1']
    #allocation5 [shape = 'u8[2048]{0}', space=vmem, size = 0x800, scoped, tag = 'output window, operand 0, single buffered']
    %6 = vsyncpa [#allocation3], 0
    %7 = vsyncpa [#allocation4], 0
    // Predicated region
    $region2: #{tpu_custom_call.1} parent=1 // pred_check
      _
    $region3: #{tpu_custom_call.1} parent=1 // pred_check_branch
      %9 = sbr.rel (0) target = $region5
    $region4: #{tpu_custom_call.1} parent=1 // pred_region
      %s11 = ssub.s32 64, 64
      %12 = vsyncadd [#allocation3], %s11
      %s14 = sshll.u32 [#allocation2], 4
      %s15 = int_to_ptr.vmem [resolvable:$true] %s14
      %17 = dma.hbm_to_vmem [thread:$0]  %s0, 64, %s15, [#allocation3]
    $region5: #{tpu_custom_call.1} parent=1 // pred_fallthru
      _
    // Predicated region
    $region6: #{tpu_custom_call.1} parent=1 // pred_check
      _
    $region7: #{tpu_custom_call.1} parent=1 // pred_check_branch
      %19 = sbr.rel (0) target = $region9
    $region8: #{tpu_custom_call.1} parent=1 // pred_region
      %20 = dma.done [#allocation3], 64
    $region9: #{tpu_custom_call.1} parent=1 // pred_fallthru
      _
    %v21 = vld [vmem:[#allocation2] sm:$0xf]
    %23 = vrot.lane.b32.xlu0 %v21, 127
    %v24 = vpop.permute.xlu0 %23
    %26 = vrot.lane.b32.xlu0 %v21, 1
    %v27 = vpop.permute.xlu0 %26
    %vm29 = vcmask 7168
    %v30 = vsel %vm29, %v24, %v27
    %v31 = vmul.f32 %v30, 0.97
    %v32 = vsub.f32 %v21, %v31
    %33 = vst [vmem:[#allocation5] sm:$0xf] %v32
    // Predicated region
    $region10: #{tpu_custom_call.1} parent=1 // pred_check
      _
    $region11: #{tpu_custom_call.1} parent=1 // pred_check_branch
      %35 = sbr.rel (0) target = $region13
    $region12: #{tpu_custom_call.1} parent=1 // pred_region
      %s37 = ssub.s32 64, 64
      %38 = vsyncadd [#allocation4], %s37
      %s40 = sshll.u32 [#allocation5], 4
      %s41 = int_to_ptr.vmem [resolvable:$true] %s40
      %43 = dma.vmem_to_hbm [thread:$0]  %s41, 64, %s1, [#allocation4]
    $region13: #{tpu_custom_call.1} parent=1 // pred_fallthru
      _
    // Predicated region
    $region14: #{tpu_custom_call.1} parent=1 // pred_check
      _
    $region15: #{tpu_custom_call.1} parent=1 // pred_check_branch
      %45 = sbr.rel (0) target = $region17
    $region16: #{tpu_custom_call.1} parent=1 // pred_region
      %46 = dma.done [#allocation4], 64
    $region17: #{tpu_custom_call.1} parent=1 // pred_fallthru
      _
    %47 = vsyncpa [#allocation3], 1
    %48 = vsyncpa [#allocation4], 1

</llo_original>
